<compile_context>
chip_gen: v5e
topology: v5e:2x2
jax: 0.10.0
libtpu: 0.0.40
codegen_flags: <defaults>
</compile_context>

<pallas_src>
import functools
import math

import jax
import jax.numpy as jnp
from jax.experimental import pallas as pl
from jax.experimental.pallas import tpu as pltpu


def _cdiv(a, b):
    return -(-a // b)


def _round_up(a, b):
    return _cdiv(a, b) * b


def _context_aware_loss_kernel(params_ref, yt_ref, yp_ref, out_ref, acc_ref, *,
                               hit_radius, miss_radius, n_flat_valid,
                               tile_rows, lane_width, has_tail_pad,
                               has_class_pad):
    c = pl.program_id(0)          # per-core (parallel) slice
    i = pl.program_id(1)          # reduction step within the slice

    @pl.when(i == 0)
    def _init():
        acc_ref[...] = jnp.zeros_like(acc_ref)

    yt = yt_ref[...].astype(jnp.float32)
    yp = yp_ref[...].astype(jnp.float32)

    k0 = params_ref[0:1, :]        # (1, W) -> broadcasts over the row tile
    k1 = params_ref[1:2, :]
    inv_k10 = params_ref[2:3, :]   # 1 / (K1 - K0)
    inv_k2 = params_ref[3:4, :]    # 1 / K2
    k3 = params_ref[4:5, :]
    inv_k23 = params_ref[5:6, :]   # 1 / (K2 - K3)

    log_miss = jnp.float32(math.log(miss_radius))
    log_one_minus_hit = jnp.float32(math.log(1.0 - hit_radius))

    # Term 1: active only where y_true < 0 (pre-action context).
    frac1 = (jnp.minimum(jnp.maximum(yt, k0), k1) - k0) * inv_k10
    inner1 = -jnp.log(yp + (1.0 - yp) * frac1) + log_miss
    term1 = jnp.where(yt < 0.0, jnp.maximum(inner1, 0.0), 0.0)

    # Term 2: active where y_true >= 0.
    a = -jnp.log(1.0 - yp + jnp.abs(yt) * inv_k2) + log_one_minus_hit
    b = -jnp.log(yp + (jnp.minimum(yt, k3) - k3) * inv_k23) + log_miss
    term2 = jnp.where(yt >= 0.0, jnp.maximum(jnp.maximum(a, b), 0.0), 0.0)

    loss = term1 + term2

    if has_tail_pad:
        # Zero out the padded tail elements (padding is a flat suffix).
        row_i = jax.lax.broadcasted_iota(jnp.int32, loss.shape, 0)
        lane_i = jax.lax.broadcasted_iota(jnp.int32, loss.shape, 1)
        base = (c * pl.num_programs(1) + i) * (tile_rows * lane_width)
        flat = base + row_i * lane_width + lane_i
        loss = jnp.where(flat < n_flat_valid, loss, 0.0)
    if has_class_pad:
        # Zero out lanes that correspond to padded class columns.
        loss = jnp.where(params_ref[6:7, :] > 0.5, loss, 0.0)

    acc_ref[...] += loss

    @pl.when(i == pl.num_programs(1) - 1)
    def _finalize():
        # Broadcast this core's partial sum across its (8, 128) output slab.
        out_ref[...] = jnp.zeros_like(out_ref) + jnp.sum(acc_ref[...])


def context_aware_loss(gt_label, pred_score, K, hit_radius=0.1,
                       miss_radius=0.9, row_tile=512, num_core_splits=2):
    assert gt_label.shape == pred_score.shape
    C = gt_label.shape[-1]
    N = int(math.prod(gt_label.shape[:-1]))
    yt2d = gt_label.reshape(N, C)
    yp2d = pred_score.reshape(N, C)

    # Lane packing: pad the class dim so that it tiles the lane axis evenly.
    if C <= 128:
        c_pad = 1
        while c_pad < C:
            c_pad *= 2            # smallest power of two >= C (divides 128)
        lane_width = 128
    else:
        c_pad = _round_up(C, 128)
        lane_width = c_pad

    if c_pad != C:
        yt2d = jnp.pad(yt2d, ((0, 0), (0, c_pad - C)))
        yp2d = jnp.pad(yp2d, ((0, 0), (0, c_pad - C)), constant_values=0.5)

    # Per-class params + hoisted reciprocals + lane-validity row, tiled along
    # lanes so the 128-wide packed layout sees the right class parameters.
    Kf = jnp.asarray(K, dtype=jnp.float32)
    k0, k1, k2, k3 = Kf[0, :], Kf[1, :], Kf[2, :], Kf[3, :]
    prm = jnp.stack([k0, k1, 1.0 / (k1 - k0), 1.0 / k2, k3, 1.0 / (k2 - k3),
                     jnp.ones_like(k0)], axis=0)                 # (7, C)
    if c_pad != C:
        prm = jnp.pad(prm, ((0, 0), (0, c_pad - C)))
    params = jnp.tile(prm, (1, lane_width // c_pad))             # (7, W)

    # Pack data to lane-dense (rows, W) and pad the tail to a tile multiple.
    n_flat_valid = N * c_pad
    rows_needed = _cdiv(n_flat_valid, lane_width)
    rows_per_split = _cdiv(rows_needed, num_core_splits)
    tile_rows = max(8, min(int(row_tile), _round_up(rows_per_split, 8)))
    tiles_per_split = _cdiv(rows_per_split, tile_rows)
    total_rows = num_core_splits * tiles_per_split * tile_rows
    padded_flat = total_rows * lane_width

    flat_yt = yt2d.reshape(-1)
    flat_yp = yp2d.reshape(-1)
    if padded_flat != n_flat_valid:
        flat_yt = jnp.pad(flat_yt, (0, padded_flat - n_flat_valid))
        flat_yp = jnp.pad(flat_yp, (0, padded_flat - n_flat_valid),
                          constant_values=0.5)
    yt_pk = flat_yt.reshape(total_rows, lane_width)
    yp_pk = flat_yp.reshape(total_rows, lane_width)

    kernel = functools.partial(
        _context_aware_loss_kernel,
        hit_radius=float(hit_radius), miss_radius=float(miss_radius),
        n_flat_valid=n_flat_valid, tile_rows=tile_rows, lane_width=lane_width,
        has_tail_pad=(padded_flat != n_flat_valid),
        has_class_pad=(c_pad != C))

    def data_map(c, i):
        return (c * tiles_per_split + i, 0)

    out = pl.pallas_call(
        kernel,
        out_shape=jax.ShapeDtypeStruct((num_core_splits * 8, 128), jnp.float32),
        grid_spec=pltpu.PrefetchScalarGridSpec(
            num_scalar_prefetch=0,
            grid=(num_core_splits, tiles_per_split),
            in_specs=[
                pl.BlockSpec((7, lane_width), lambda c, i: (0, 0)),   # params
                pl.BlockSpec((tile_rows, lane_width), data_map),      # y_true
                pl.BlockSpec((tile_rows, lane_width), data_map),      # y_pred
            ],
            out_specs=pl.BlockSpec((8, 128), lambda c, i: (c, 0)),
            scratch_shapes=[pltpu.VMEM((tile_rows, lane_width), jnp.float32)],
        ),
        compiler_params=pltpu.CompilerParams(
            dimension_semantics=("parallel", "arbitrary")),
    )(params, yt_pk, yp_pk)

    # Each core's (8, 128) slab is a broadcast of its partial sum.
    return jnp.sum(out[::8, 0])


def _reference_loss(gt_label, pred_score, K, hit_radius=0.1, miss_radius=0.9):
    """Pure-JAX transcription of the PyTorch forward (for verification)."""
    yt = gt_label.astype(jnp.float32)
    yp = pred_score.astype(jnp.float32)
    k0, k1, k2, k3 = K[0, :], K[1, :], K[2, :], K[3, :]
    term1 = -jnp.minimum(0.0 * yt, jnp.sign(yt)) * jnp.maximum(
        0.0 * yp,
        -jnp.log(yp + (1.0 - yp)
                 * (jnp.minimum(jnp.maximum(yt, k0), k1) - k0) / (k1 - k0))
        + jnp.log(miss_radius))
    term2 = (1.0 - jnp.maximum(0.0 * yt, jnp.sign(-yt))) * jnp.maximum(
        0.0 * yp,
        jnp.maximum(
            -jnp.log(1.0 - yp + jnp.abs(yt) / k2) + jnp.log(1.0 - hit_radius),
            -jnp.log(yp + (jnp.minimum(yt, k3) - k3) / (k2 - k3))
            + jnp.log(miss_radius)))
    return jnp.sum(term1 + term2)


if __name__ == "__main__":
    key = jax.random.PRNGKey(0)
    ka, kb, kc, kd = jax.random.split(key, 4)

    # --- Test 1: CALF-like shapes at small scale (C=4 -> packed 32x/lane) ---
    B, T, C = 2, 16, 4
    cls = jnp.arange(C, dtype=jnp.float32)
    K = jnp.stack([
        -40.0 - 2.0 * cls,   # K[0]
        -10.0 - 1.0 * cls,   # K[1]
        10.0 + 1.0 * cls,    # K[2]
        40.0 + 2.0 * cls,    # K[3]
    ], axis=0)
    gt_label = jnp.round(
        jax.random.uniform(ka, (B, T, C), minval=-50.0, maxval=50.0))
    gt_label = gt_label.at[:, 0, :].set(0.0)
    pred_score = jax.random.uniform(kb, (B, T, C), minval=0.05, maxval=0.95)

    loss = jax.block_until_ready(context_aware_loss(gt_label, pred_score, K))
    ref = _reference_loss(gt_label, pred_score, K)
    assert jnp.allclose(loss, ref, rtol=1e-4, atol=1e-3), (loss, ref)

    # --- Test 2: non-power-of-two class count (exercises lane/tail padding) -
    B2, T2, C2 = 4, 50, 17
    cls2 = jnp.arange(C2, dtype=jnp.float32)
    K2 = jnp.stack([-40.0 - 2.0 * cls2, -10.0 - 1.0 * cls2,
                    10.0 + 1.0 * cls2, 40.0 + 2.0 * cls2], axis=0)
    gt2 = jnp.round(
        jax.random.uniform(kc, (B2, T2, C2), minval=-60.0, maxval=60.0))
    pr2 = jax.random.uniform(kd, (B2, T2, C2), minval=0.05, maxval=0.95)

    loss2 = jax.block_until_ready(context_aware_loss(gt2, pr2, K2))
    ref2 = _reference_loss(gt2, pr2, K2)
    assert jnp.allclose(loss2, ref2, rtol=1e-4, atol=1e-3), (loss2, ref2)

    print("KERNEL_OK")
</pallas_src>

<mosaic_0001>
module attributes {stable_mosaic.version = 11 : i64} {
  func.func @_context_aware_loss_kernel(%arg0: i32, %arg1: i32, %arg2: memref<7x128xf32, #tpu.memory_space<vmem>>, %arg3: memref<8x128xf32, #tpu.memory_space<vmem>>, %arg4: memref<8x128xf32, #tpu.memory_space<vmem>>, %arg5: memref<8x128xf32, #tpu.memory_space<vmem>>, %arg6: memref<8x128xf32, #tpu.memory_space<vmem>>) attributes {dimension_semantics = [#tpu.dimension_semantics<parallel>, #tpu.dimension_semantics<arbitrary>], iteration_bounds = array<i64: 2, 1>, scalar_prefetch = 0 : i64, scratch_operands = 1 : i64, tpu.core_type = #tpu.core_type<tc>, window_params = [{pipeline_mode = #tpu.pipeline_mode<synchronous>, transform_indices = @transform_0, window_bounds = array<i64: 7, 128>}, {transform_indices = @transform_1, window_bounds = array<i64: 8, 128>}, {transform_indices = @transform_2, window_bounds = array<i64: 8, 128>}, {transform_indices = @transform_3, window_bounds = array<i64: 8, 128>}]} {
    %c0_i32 = arith.constant 0 : i32
    %0 = arith.cmpi eq, %arg1, %c0_i32 : i32
    %1 = arith.extui %0 : i1 to i32
    %c0_i32_0 = arith.constant 0 : i32
    %2 = arith.cmpi ne, %1, %c0_i32_0 : i32
    scf.if %2 {
      %cst_32 = arith.constant 0.000000e+00 : f32
      %85 = vector.broadcast %cst_32 : f32 to vector<8x128xf32>
      %c0_33 = arith.constant 0 : index
      %c0_34 = arith.constant 0 : index
      %86 = vector.load %arg6[%c0_33, %c0_34] : memref<8x128xf32, #tpu.memory_space<vmem>>, vector<8x128xf32>
      tpu.vector_store %arg6[%c0_33, %c0_34], %85 {strides = array<i32>} : memref<8x128xf32, #tpu.memory_space<vmem>>, vector<8x128xf32>,
    } else {
    }
    %c0 = arith.constant 0 : index
    %c0_1 = arith.constant 0 : index
    %3 = vector.load %arg3[%c0, %c0_1] : memref<8x128xf32, #tpu.memory_space<vmem>>, vector<8x128xf32>
    %c0_2 = arith.constant 0 : index
    %c0_3 = arith.constant 0 : index
    %4 = vector.load %arg4[%c0_2, %c0_3] : memref<8x128xf32, #tpu.memory_space<vmem>>, vector<8x128xf32>
    %c0_4 = arith.constant 0 : index
    %c0_5 = arith.constant 0 : index
    %5 = vector.load %arg2[%c0_4, %c0_5] : memref<7x128xf32, #tpu.memory_space<vmem>>, vector<1x128xf32>
    %c1 = arith.constant 1 : index
    %c0_6 = arith.constant 0 : index
    %6 = vector.load %arg2[%c1, %c0_6] : memref<7x128xf32, #tpu.memory_space<vmem>>, vector<1x128xf32>
    %c2 = arith.constant 2 : index
    %c0_7 = arith.constant 0 : index
    %7 = vector.load %arg2[%c2, %c0_7] : memref<7x128xf32, #tpu.memory_space<vmem>>, vector<1x128xf32>
    %c3 = arith.constant 3 : index
    %c0_8 = arith.constant 0 : index
    %8 = vector.load %arg2[%c3, %c0_8] : memref<7x128xf32, #tpu.memory_space<vmem>>, vector<1x128xf32>
    %c4 = arith.constant 4 : index
    %c0_9 = arith.constant 0 : index
    %9 = vector.load %arg2[%c4, %c0_9] : memref<7x128xf32, #tpu.memory_space<vmem>>, vector<1x128xf32>
    %c5 = arith.constant 5 : index
    %c0_10 = arith.constant 0 : index
    %10 = vector.load %arg2[%c5, %c0_10] : memref<7x128xf32, #tpu.memory_space<vmem>>, vector<1x128xf32>
    %11 = vector.broadcast %5 : vector<1x128xf32> to vector<8x128xf32>
    %12 = arith.maximumf %3, %11 : vector<8x128xf32>
    %13 = vector.broadcast %6 : vector<1x128xf32> to vector<8x128xf32>
    %14 = arith.minimumf %12, %13 : vector<8x128xf32>
    %15 = vector.broadcast %5 : vector<1x128xf32> to vector<8x128xf32>
    %16 = arith.subf %14, %15 : vector<8x128xf32>
    %17 = vector.broadcast %7 : vector<1x128xf32> to vector<8x128xf32>
    %18 = arith.mulf %16, %17 : vector<8x128xf32>
    %cst = arith.constant 1.000000e+00 : f32
    %19 = vector.broadcast %cst : f32 to vector<8x128xf32>
    %20 = arith.subf %19, %4 : vector<8x128xf32>
    %21 = arith.mulf %20, %18 : vector<8x128xf32>
    %22 = arith.addf %4, %21 : vector<8x128xf32>
    %23 = math.log %22 : vector<8x128xf32>
    %cst_11 = arith.constant 0.000000e+00 : f32
    %24 = vector.broadcast %cst_11 : f32 to vector<8x128xf32>
    %25 = arith.subf %24, %23 : vector<8x128xf32>
    %cst_12 = arith.constant -0.105360515 : f32
    %26 = vector.broadcast %cst_12 : f32 to vector<8x128xf32>
    %27 = arith.addf %25, %26 : vector<8x128xf32>
    %cst_13 = arith.constant 0.000000e+00 : f32
    %28 = vector.broadcast %cst_13 : f32 to vector<8x128xf32>
    %29 = arith.cmpf olt, %3, %28 : vector<8x128xf32>
    %cst_14 = arith.constant 0.000000e+00 : f32
    %30 = vector.broadcast %cst_14 : f32 to vector<8x128xf32>
    %31 = arith.maximumf %27, %30 : vector<8x128xf32>
    %cst_15 = arith.constant 0.000000e+00 : f32
    %32 = vector.broadcast %cst_15 : f32 to vector<8x128xf32>
    %33 = arith.select %29, %31, %32 : vector<8x128xi1>, vector<8x128xf32>
    %cst_16 = arith.constant 1.000000e+00 : f32
    %34 = vector.broadcast %cst_16 : f32 to vector<8x128xf32>
    %35 = arith.subf %34, %4 : vector<8x128xf32>
    %36 = math.absf %3 : vector<8x128xf32>
    %37 = vector.broadcast %8 : vector<1x128xf32> to vector<8x128xf32>
    %38 = arith.mulf %36, %37 : vector<8x128xf32>
    %39 = arith.addf %35, %38 : vector<8x128xf32>
    %40 = math.log %39 : vector<8x128xf32>
    %cst_17 = arith.constant 0.000000e+00 : f32
    %41 = vector.broadcast %cst_17 : f32 to vector<8x128xf32>
    %42 = arith.subf %41, %40 : vector<8x128xf32>
    %cst_18 = arith.constant -0.105360515 : f32
    %43 = vector.broadcast %cst_18 : f32 to vector<8x128xf32>
    %44 = arith.addf %42, %43 : vector<8x128xf32>
    %45 = vector.broadcast %9 : vector<1x128xf32> to vector<8x128xf32>
    %46 = arith.minimumf %3, %45 : vector<8x128xf32>
    %47 = vector.broadcast %9 : vector<1x128xf32> to vector<8x128xf32>
    %48 = arith.subf %46, %47 : vector<8x128xf32>
    %49 = vector.broadcast %10 : vector<1x128xf32> to vector<8x128xf32>
    %50 = arith.mulf %48, %49 : vector<8x128xf32>
    %51 = arith.addf %4, %50 : vector<8x128xf32>
    %52 = math.log %51 : vector<8x128xf32>
    %cst_19 = arith.constant 0.000000e+00 : f32
    %53 = vector.broadcast %cst_19 : f32 to vector<8x128xf32>
    %54 = arith.subf %53, %52 : vector<8x128xf32>
    %cst_20 = arith.constant -0.105360515 : f32
    %55 = vector.broadcast %cst_20 : f32 to vector<8x128xf32>
    %56 = arith.addf %54, %55 : vector<8x128xf32>
    %cst_21 = arith.constant 0.000000e+00 : f32
    %57 = vector.broadcast %cst_21 : f32 to vector<8x128xf32>
    %58 = arith.cmpf oge, %3, %57 : vector<8x128xf32>
    %59 = arith.maximumf %44, %56 : vector<8x128xf32>
    %cst_22 = arith.constant 0.000000e+00 : f32
    %60 = vector.broadcast %cst_22 : f32 to vector<8x128xf32>
    %61 = arith.maximumf %59, %60 : vector<8x128xf32>
    %cst_23 = arith.constant 0.000000e+00 : f32
    %62 = vector.broadcast %cst_23 : f32 to vector<8x128xf32>
    %63 = arith.select %58, %61, %62 : vector<8x128xi1>, vector<8x128xf32>
    %64 = arith.addf %33, %63 : vector<8x128xf32>
    %65 = tpu.iota {dimensions = array<i32: 0>} : vector<8x128xi32>
    %66 = tpu.iota {dimensions = array<i32: 1>} : vector<8x128xi32>
    %c1_i32 = arith.constant 1 : i32
    %67 = arith.muli %arg0, %c1_i32 : i32
    %68 = arith.addi %67, %arg1 : i32
    %c1024_i32 = arith.constant 1024 : i32
    %69 = arith.muli %68, %c1024_i32 : i32
    %c128_i32 = arith.constant 128 : i32
    %70 = vector.broadcast %c128_i32 : i32 to vector<8x128xi32>
    %71 = arith.muli %65, %70 : vector<8x128xi32>
    %72 = vector.broadcast %69 : i32 to vector<8x128xi32>
    %73 = arith.addi %72, %71 : vector<8x128xi32>
    %74 = arith.addi %73, %66 : vector<8x128xi32>
    %c128_i32_24 = arith.constant 128 : i32
    %75 = vector.broadcast %c128_i32_24 : i32 to vector<8x128xi32>
    %76 = arith.cmpi slt, %74, %75 : vector<8x128xi32>
    %cst_25 = arith.constant 0.000000e+00 : f32
    %77 = vector.broadcast %cst_25 : f32 to vector<8x128xf32>
    %78 = arith.select %76, %64, %77 : vector<8x128xi1>, vector<8x128xf32>
    %c0_26 = arith.constant 0 : index
    %c0_27 = arith.constant 0 : index
    %79 = vector.load %arg6[%c0_26, %c0_27] : memref<8x128xf32, #tpu.memory_space<vmem>>, vector<8x128xf32>
    %80 = arith.addf %79, %78 : vector<8x128xf32>
    %c0_28 = arith.constant 0 : index
    %c0_29 = arith.constant 0 : index
    %81 = vector.load %arg6[%c0_28, %c0_29] : memref<8x128xf32, #tpu.memory_space<vmem>>, vector<8x128xf32>
    tpu.vector_store %arg6[%c0_28, %c0_29], %80 {strides = array<i32>} : memref<8x128xf32, #tpu.memory_space<vmem>>, vector<8x128xf32>,
    %c0_i32_30 = arith.constant 0 : i32
    %82 = arith.cmpi eq, %arg1, %c0_i32_30 : i32
    %83 = arith.extui %82 : i1 to i32
    %c0_i32_31 = arith.constant 0 : i32
    %84 = arith.cmpi ne, %83, %c0_i32_31 : i32
    scf.if %84 {
      %cst_32 = arith.constant 0.000000e+00 : f32
      %85 = vector.broadcast %cst_32 : f32 to vector<8x128xf32>
      %c0_33 = arith.constant 0 : index
      %c0_34 = arith.constant 0 : index
      %86 = vector.load %arg6[%c0_33, %c0_34] : memref<8x128xf32, #tpu.memory_space<vmem>>, vector<8x128xf32>
      %87 = vector.shape_cast %86 : vector<8x128xf32> to vector<1x8x128xf32>
      %cst_35 = arith.constant dense<0.000000e+00> : vector<1xf32>
      %88 = vector.multi_reduction <add>, %87, %cst_35 [1, 2] : vector<1x8x128xf32> to vector<1xf32>
      %89 = vector.shape_cast %88 : vector<1xf32> to vector<1x1x1xf32>
      %90 = vector.extract %89[0, 0, 0] : f32 from vector<1x1x1xf32>
      %91 = vector.broadcast %90 : f32 to vector<8x128xf32>
      %92 = arith.addf %85, %91 : vector<8x128xf32>
      %c0_36 = arith.constant 0 : index
      %c0_37 = arith.constant 0 : index
      %93 = vector.load %arg5[%c0_36, %c0_37] : memref<8x128xf32, #tpu.memory_space<vmem>>, vector<8x128xf32>
      tpu.vector_store %arg5[%c0_36, %c0_37], %92 {strides = array<i32>} : memref<8x128xf32, #tpu.memory_space<vmem>>, vector<8x128xf32>,
    } else {
    }
    return
  }
  func.func @transform_0(%arg0: i32, %arg1: i32) -> (i32, i32) {
    %c0_i32 = arith.constant 0 : i32
    %c0_i32_0 = arith.constant 0 : i32
    %c0_i32_1 = arith.constant 0 : i32
    return %c0_i32, %c0_i32_0 : i32, i32
  }
  func.func @transform_1(%arg0: i32, %arg1: i32) -> (i32, i32) {
    %c1_i32 = arith.constant 1 : i32
    %0 = arith.muli %arg0, %c1_i32 : i32
    %1 = arith.addi %0, %arg1 : i32
    %c0_i32 = arith.constant 0 : i32
    %c0_i32_0 = arith.constant 0 : i32
    return %1, %c0_i32 : i32, i32
  }
  func.func @transform_2(%arg0: i32, %arg1: i32) -> (i32, i32) {
    %c1_i32 = arith.constant 1 : i32
    %0 = arith.muli %arg0, %c1_i32 : i32
    %1 = arith.addi %0, %arg1 : i32
    %c0_i32 = arith.constant 0 : i32
    %c0_i32_0 = arith.constant 0 : i32
    return %1, %c0_i32 : i32, i32
  }
  func.func @transform_3(%arg0: i32, %arg1: i32) -> (i32, i32) {
    %c0_i32 = arith.constant 0 : i32
    %c0_i32_0 = arith.constant 0 : i32
    return %arg0, %c0_i32 : i32, i32
  }
}

</mosaic_0001>

<llo_original>
// kernel: tpu_custom_call.1
$region0: #{tpu_custom_call.1}
  #allocation0 [shape = 'u32[]', space=smem, size = 0x4, offset = 0x4, fixed_abs, tag = 'smem constant byte address 0x4 - core index']
  #allocation1 [shape = 'u32[72,128]{1,0:T(1,128)}', space=vmem, size = 0x9000, scoped, tag = 'internal scratch']
  #allocation2 [shape = 'f32[8,128]{1,0:T(8,128)}', space=vmem, size = 0x1000, scoped, tag = 'scratch operand']
  %s0 = inlined_call_operand.hbm [shape: f32[7,128], index: 0, kind: input, shape index: {}]
  %s1 = inlined_call_operand.hbm [shape: f32[16,128], index: 1, kind: input, shape index: {}]
  %s2 = inlined_call_operand.hbm [shape: f32[16,128], index: 2, kind: input, shape index: {}]
  %s3 = inlined_call_operand.hbm [shape: f32[16,128], index: 3, kind: output, shape index: {}]
  %s4 = sld [smem:[#allocation0]]
  $region65: #{tpu_custom_call.1} parent=0
    _
  %s6 = ssub.s32 1, %s4
  %s7 = scalar_select 0, %s6, %s4
  $region1: #{tpu_custom_call.1} parent=0
    #allocation3 [shape = 'u8[4096]{0}', space=vmem, size = 0x1000, scoped, tag = 'input window, operand 0, single buffered']
    #allocation4 [shape = 's32[2]{0}', space=sflag, size = 0x8, scoped, tag = 'scoped memory for tpu_custom_call.1']
    #allocation5 [shape = 's32[2]{0}', space=sflag, size = 0x8, scoped, tag = 'scoped memory for tpu_custom_call.1']
    #allocation6 [shape = 'u8[8192]{0}', space=vmem, size = 0x2000, scoped, tag = 'input window, operand 1']
    #allocation7 [shape = 's32[2]{0}', space=sflag, size = 0x8, scoped, tag = 'scoped memory for tpu_custom_call.1']
    #allocation8 [shape = 'u8[8192]{0}', space=vmem, size = 0x2000, scoped, tag = 'input window, operand 2']
    #allocation9 [shape = 'u8[8192]{0}', space=vmem, size = 0x2000, scoped, tag = 'output window, operand 0']
    %8 = vsyncpa [#allocation4], 0
    %9 = vsyncpa [#allocation7], 0
    %s10 = scalar_lea.sflag [#allocation7], 1
    %11 = vsyncpa %s10, 0
    %12 = vsyncpa [#allocation5], 0
    %s13 = scalar_lea.sflag [#allocation5], 1
    %14 = vsyncpa %s13, 0
    loop: start=0, step=1, limit=4
    $region2: #{tpu_custom_call.1} parent=1 // loop_pre_header
      _
    $region3: #{tpu_custom_call.1} parent=1 // loop_header
      %s16 = sphi 0, %s20
      %p17 = scmp.ge.s32.totalorder %s16, 4
      %s23 = sphi 0, %s35
      %s24 = sphi 0, %s31
      %s25 = sphi 0, %s23
      %s26 = sphi 0, %s24
      %s27 = sphi 0, %s25
      %s28 = sphi 0, %s26
      %s36 = sphi 0, %s36
      %s38 = sphi 0, %s36
      %s39 = sphi 0, %s38
      %s53 = sphi 0, %s39
      %s61 = sphi 0, %s63
      %s64 = sphi 0, %s61
      %s65 = sphi 0, %s64
      %s81 = sphi 0, %s65
      %s89 = sphi 0, %s91
      %s92 = sphi 0, %s89
      %s93 = sphi 0, %s92
      %s109 = sphi 0, %s93
      %s115 = sphi 0, %s117
      %s118 = sphi 0, %s115
      %s119 = sphi 0, %s118
      %s135 = sphi 0, %s119
    $region4: #{tpu_custom_call.1} parent=1 // loop_header_branch
      %19 = sbr.rel (%p17) target = $region8
    $region5: #{tpu_custom_call.1} parent=1 // loop_body
      %s21 = ssub.s32 %s16, 1
      %s22 = ssub.s32 %s16, 2
      %s29 = sadd.s32 1, %s24
      %p30 = scmp.ge.s32.totalorder %s29, 1
      %s31 = scalar_select %p30, 0, %s29
      %s32 = sadd.s32 1, %s23
      %s33 = scalar_select %p30, %s32, %s23
      %p34 = scmp.ge.s32.totalorder %s33, 2
      %s35 = scalar_select %p34, 0, %s33
      %s37 = sadd.s32 %s36, 1
      %p40 = scmp.eq.s32.totalorder %s16, 1
      %p41 = scmp.ne.s32.totalorder %s36, %s38
      %p42 = scmp.eq.s32.totalorder %s16, 0
      %p43 = por %p41, %p42
      %p44 = scmp.ne.s32.totalorder %s36, %s38
      %p45 = scmp.eq.s32.totalorder %s21, 1
      %p46 = por %p44, %p45
      %p47 = scmp.ne.s32.totalorder %s38, %s39
      %p48 = scmp.eq.s32.totalorder %s21, 0
      %p49 = por %p47, %p48
      %p50 = scmp.ne.s32.totalorder %s38, %s39
      %p51 = scmp.eq.s32.totalorder %s22, 1
      %p52 = por %p50, %p51
      %p54 = scmp.ne.s32.totalorder %s39, %s53
      %p55 = scmp.eq.s32.totalorder %s22, 0
      %p56 = por %p54, %p55
      %s57 = sadd.s32 %s23, %s24
      %s58 = sadd.s32 %s35, %s31
      %s59 = ssub.s32 %s57, %s58
      %p60 = scmp.eq.s32.totalorder %s59, 0
      %s62 = sadd.s32 %s61, 1
      %s63 = scalar_select %p60, %s61, %s62
      %p66 = pneg %p60
      %p67 = scmp.eq.s32.totalorder %s16, 1
      %p68 = por %p66, %p67
      %p69 = scmp.ne.s32.totalorder %s61, %s64
      %p70 = scmp.eq.s32.totalorder %s16, 0
      %p71 = por %p69, %p70
      %p72 = scmp.ne.s32.totalorder %s61, %s64
      %p73 = scmp.eq.s32.totalorder %s21, 1
      %p74 = por %p72, %p73
      %p75 = scmp.ne.s32.totalorder %s64, %s65
      %p76 = scmp.eq.s32.totalorder %s21, 0
      %p77 = por %p75, %p76
      %p78 = scmp.ne.s32.totalorder %s64, %s65
      %p79 = scmp.eq.s32.totalorder %s22, 1
      %p80 = por %p78, %p79
      %p82 = scmp.ne.s32.totalorder %s65, %s81
      %p83 = scmp.eq.s32.totalorder %s22, 0
      %p84 = por %p82, %p83
      %s85 = sadd.s32 %s23, %s24
      %s86 = sadd.s32 %s35, %s31
      %s87 = ssub.s32 %s85, %s86
      %p88 = scmp.eq.s32.totalorder %s87, 0
      %s90 = sadd.s32 %s89, 1
      %s91 = scalar_select %p88, %s89, %s90
      %p94 = pneg %p88
      %p95 = scmp.eq.s32.totalorder %s16, 1
      %p96 = por %p94, %p95
      %p97 = scmp.ne.s32.totalorder %s89, %s92
      %p98 = scmp.eq.s32.totalorder %s16, 0
      %p99 = por %p97, %p98
      %p100 = scmp.ne.s32.totalorder %s89, %s92
      %p101 = scmp.eq.s32.totalorder %s21, 1
      %p102 = por %p100, %p101
      %p103 = scmp.ne.s32.totalorder %s92, %s93
      %p104 = scmp.eq.s32.totalorder %s21, 0
      %p105 = por %p103, %p104
      %p106 = scmp.ne.s32.totalorder %s92, %s93
      %p107 = scmp.eq.s32.totalorder %s22, 1
      %p108 = por %p106, %p107
      %p110 = scmp.ne.s32.totalorder %s93, %s109
      %p111 = scmp.eq.s32.totalorder %s22, 0
      %p112 = por %p110, %p111
      %s113 = ssub.s32 %s23, %s35
      %p114 = scmp.eq.s32.totalorder %s113, 0
      %s116 = sadd.s32 %s115, 1
      %s117 = scalar_select %p114, %s115, %s116
      %p120 = pneg %p114
      %p121 = scmp.eq.s32.totalorder %s16, 1
      %p122 = por %p120, %p121
      %p123 = scmp.ne.s32.totalorder %s115, %s118
      %p124 = scmp.eq.s32.totalorder %s16, 0
      %p125 = por %p123, %p124
      %p126 = scmp.ne.s32.totalorder %s115, %s118
      %p127 = scmp.eq.s32.totalorder %s21, 1
      %p128 = por %p126, %p127
      %p129 = scmp.ne.s32.totalorder %s118, %s119
      %p130 = scmp.eq.s32.totalorder %s21, 0
      %p131 = por %p129, %p130
      %p132 = scmp.ne.s32.totalorder %s118, %s119
      %p133 = scmp.eq.s32.totalorder %s22, 1
      %p134 = por %p132, %p133
      %p136 = scmp.ne.s32.totalorder %s119, %s135
      %p137 = scmp.eq.s32.totalorder %s22, 0
      %p138 = por %p136, %p137
      %p139 = scmp.le.s32.totalorder 1, %s16
      %p140 = scmp.lt.s32.totalorder %s16, 3
      %p141 = pnand %p139, %p140
      %p142 = pneg %p141
      // Predicated region
      $region9: #{tpu_custom_call.1} parent=5 // pred_check
        _
      $region10: #{tpu_custom_call.1} parent=5 // pred_check_branch
        %144 = sbr.rel (%p141) target = $region12
      $region11: #{tpu_custom_call.1} parent=5 // pred_region
        %s145 = ssub.s32 %s16, 1
        // Predicated region
        $region13: #{tpu_custom_call.1} parent=11 // pred_check
          %p146 = pneg %p49
        $region14: #{tpu_custom_call.1} parent=11 // pred_check_branch
          %148 = sbr.rel (%p146) target = $region16
        $region15: #{tpu_custom_call.1} parent=11 // pred_region
          %150 = vsyncadd [#allocation4], 0
          %s152 = sshll.u32 %s0, 4
          %s153 = int_to_ptr.hbm [resolvable:$true] %s152
          %s154 = sshll.u32 [#allocation3], 4
          %s155 = int_to_ptr.vmem [resolvable:$true] %s154
          %157 = dma.hbm_to_vmem [thread:$0]  %s153, 128, %s155, [#allocation4]
        $region16: #{tpu_custom_call.1} parent=11 // pred_fallthru
          _
      $region12: #{tpu_custom_call.1} parent=5 // pred_fallthru
        _
      %p158 = scmp.lt.s32.totalorder %s16, 2
      // Predicated region
      $region17: #{tpu_custom_call.1} parent=5 // pred_check
        %p159 = pneg %p158
      $region18: #{tpu_custom_call.1} parent=5 // pred_check_branch
        %161 = sbr.rel (%p159) target = $region20
      $region19: #{tpu_custom_call.1} parent=5 // pred_region
        // Predicated region
        $region21: #{tpu_custom_call.1} parent=19 // pred_check
          %p162 = pneg %p71
        $region22: #{tpu_custom_call.1} parent=19 // pred_check_branch
          %164 = sbr.rel (%p162) target = $region24
        $region23: #{tpu_custom_call.1} parent=19 // pred_region
          %s165 = sand.u32 %s16, 1
          %s166 = scalar_lea.sflag [#allocation7], %s165
          %s167 = sand.u32 %s61, 1
          %s168 = smul.addr %s167, 8
          %s169 = scalar_lea.vmem [#allocation6], %s168
          %s170 = sadd.s32 %s23, %s24
          %172 = vsyncadd %s166, 0
          %s173 = smul.addr %s170, 8
          %s174 = scalar_lea.hbm %s1, %s173
          %s176 = sshll.u32 %s174, 4
          %s177 = int_to_ptr.hbm [resolvable:$true] %s176
          %s178 = sshll.u32 %s169, 4
          %s179 = int_to_ptr.vmem [resolvable:$true] %s178
          %181 = dma.hbm_to_vmem [thread:$0]  %s177, 128, %s179, %s166
        $region24: #{tpu_custom_call.1} parent=19 // pred_fallthru
          _
        // Predicated region
        $region25: #{tpu_custom_call.1} parent=19 // pred_check
          %p182 = pneg %p99
        $region26: #{tpu_custom_call.1} parent=19 // pred_check_branch
          %184 = sbr.rel (%p182) target = $region28
        $region27: #{tpu_custom_call.1} parent=19 // pred_region
          %s185 = sand.u32 %s16, 1
          %s186 = scalar_lea.sflag [#allocation7], %s185
          %s187 = sand.u32 %s89, 1
          %s188 = smul.addr %s187, 8
          %s189 = scalar_lea.vmem [#allocation8], %s188
          %s190 = sadd.s32 %s23, %s24
          %192 = vsyncadd %s186, 0
          %s193 = smul.addr %s190, 8
          %s194 = scalar_lea.hbm %s2, %s193
          %s196 = sshll.u32 %s194, 4
          %s197 = int_to_ptr.hbm [resolvable:$true] %s196
          %s198 = sshll.u32 %s189, 4
          %s199 = int_to_ptr.vmem [resolvable:$true] %s198
          %201 = dma.hbm_to_vmem [thread:$0]  %s197, 128, %s199, %s186
        $region28: #{tpu_custom_call.1} parent=19 // pred_fallthru
          _
      $region20: #{tpu_custom_call.1} parent=5 // pred_fallthru
        _
      %p202 = scmp.le.s32.totalorder 1, %s16
      %p203 = scmp.lt.s32.totalorder %s16, 3
      %p204 = pnand %p202, %p203
      %p205 = pneg %p204
      // Predicated region
      $region29: #{tpu_custom_call.1} parent=5 // pred_check
        _
      $region30: #{tpu_custom_call.1} parent=5 // pred_check_branch
        %207 = sbr.rel (%p204) target = $region32
      $region31: #{tpu_custom_call.1} parent=5 // pred_region
        %s208 = ssub.s32 %s16, 1
        // Predicated region
        $region33: #{tpu_custom_call.1} parent=31 // pred_check
          %p209 = pneg %p49
        $region34: #{tpu_custom_call.1} parent=31 // pred_check_branch
          %211 = sbr.rel (%p209) target = $region36
        $region35: #{tpu_custom_call.1} parent=31 // pred_region
          %213 = dma.done [#allocation4], 128
        $region36: #{tpu_custom_call.1} parent=31 // pred_fallthru
          _
        %s214 = sand.u32 %s21, 1
        %s215 = scalar_lea.sflag [#allocation7], %s214
        %s216 = sand.u32 %s64, 1
        %s217 = smul.addr %s216, 8
        %s218 = scalar_lea.vmem [#allocation6], %s217
        // Predicated region
        $region37: #{tpu_custom_call.1} parent=31 // pred_check
          %p219 = pneg %p77
        $region38: #{tpu_custom_call.1} parent=31 // pred_check_branch
          %221 = sbr.rel (%p219) target = $region40
        $region39: #{tpu_custom_call.1} parent=31 // pred_region
          %223 = dma.done %s215, 128
        $region40: #{tpu_custom_call.1} parent=31 // pred_fallthru
          _
        %s224 = sand.u32 %s21, 1
        %s225 = scalar_lea.sflag [#allocation7], %s224
        %s226 = sand.u32 %s92, 1
        %s227 = smul.addr %s226, 8
        %s228 = scalar_lea.vmem [#allocation8], %s227
        // Predicated region
        $region41: #{tpu_custom_call.1} parent=31 // pred_check
          %p229 = pneg %p105
        $region42: #{tpu_custom_call.1} parent=31 // pred_check_branch
          %231 = sbr.rel (%p229) target = $region44
        $region43: #{tpu_custom_call.1} parent=31 // pred_region
          %233 = dma.done %s225, 128
        $region44: #{tpu_custom_call.1} parent=31 // pred_fallthru
          _
        %p234 = pneg %p49
        %p235 = pneg %p46
        %s236 = sand.u32 %s21, 1
        %s237 = scalar_lea.sflag [#allocation7], %s236
        %s238 = sand.u32 %s64, 1
        %s239 = smul.addr %s238, 8
        %s240 = scalar_lea.vmem [#allocation6], %s239
        %p241 = pneg %p77
        %p242 = pneg %p74
        %s243 = sand.u32 %s21, 1
        %s244 = scalar_lea.sflag [#allocation7], %s243
        %s245 = sand.u32 %s92, 1
        %s246 = smul.addr %s245, 8
        %s247 = scalar_lea.vmem [#allocation8], %s246
        %p248 = pneg %p105
        %p249 = pneg %p102
        %p250 = pneg %p131
        %p251 = pneg %p128
        %s252 = sand.u32 %s118, 1
        %s253 = scalar_lea.sflag [#allocation5], %s252
        %s254 = sand.u32 %s118, 1
        %s255 = smul.addr %s254, 8
        %s256 = scalar_lea.vmem [#allocation9], %s255
        %s257 = sadd.s32 %s25, %s26
        %s258 = sadd.s32 %s25, %s26
        %p259 = scmp.eq.s32.totalorder %s26, 0
        // Predicated region
        $region45: #{tpu_custom_call.1} parent=31 // pred_check
          %p260 = pneg %p259
        $region46: #{tpu_custom_call.1} parent=31 // pred_check_branch
          %262 = sbr.rel (%p260) target = $region48
        $region47: #{tpu_custom_call.1} parent=31 // pred_region
          %263 = vst [vmem:[#allocation2] sm:$0xff] 0.0
        $region48: #{tpu_custom_call.1} parent=31 // pred_fallthru
          _
        %v264 = vld [vmem:[%s218] sm:$0xff]
        %v265 = vld [vmem:[%s228] sm:$0xff]
        %v266 = vld [vmem:[#allocation3] sm:$0x1]
        %v267 = vld [vmem:[#allocation3 + $0x1] sm:$0x1]
        %v268 = vld [vmem:[#allocation3 + $0x2] sm:$0x1]
        %v269 = vld [vmem:[#allocation3 + $0x3] sm:$0x1]
        %v270 = vld [vmem:[#allocation3 + $0x4] sm:$0x1]
        %v271 = vld [vmem:[#allocation3 + $0x5] sm:$0x1]
        %v272 = vperm.slane %v266, 0
        %v273 = vmax.f32 %v264, %v272
        %v274 = vperm.slane %v267, 0
        %v275 = vmin.f32 %v273, %v274
        %v276 = vsub.f32 %v275, %v272
        %v277 = vperm.slane %v268, 0
        %v278 = vmul.f32 %v276, %v277
        %v279 = vsub.f32 1.0, %v265
        %v280 = vmul.f32 %v279, %v278
        %v281 = vadd.f32 %v265, %v280
        %v282 = vlog2.pop %v281
        %v283 = vmul.f32 %v282, 0.6931472
        %v284 = vsub.f32 0.0, %v283
        %v285 = vadd.f32 %v284, -0.105360515
        %vm286 = vcmp.lt.f32.partialorder %v264, 0.0
        %v287 = vmax.f32 %v285, 0.0
        %v288 = vsel %vm286, %v287, 0.0
        %v289 = vand.u32 2147483647, %v264
        %v290 = vperm.slane %v269, 0
        %v291 = vmul.f32 %v289, %v290
        %v292 = vadd.f32 %v279, %v291
        %v293 = vlog2.pop %v292
        %v294 = vmul.f32 %v293, 0.6931472
        %v295 = vsub.f32 0.0, %v294
        %v296 = vadd.f32 %v295, -0.105360515
        %v297 = vperm.slane %v270, 0
        %v298 = vmin.f32 %v264, %v297
        %v299 = vsub.f32 %v298, %v297
        %v300 = vperm.slane %v271, 0
        %v301 = vmul.f32 %v299, %v300
        %v302 = vadd.f32 %v265, %v301
        %v303 = vlog2.pop %v302
        %v304 = vmul.f32 %v303, 0.6931472
        %v305 = vsub.f32 0.0, %v304
        %v306 = vadd.f32 %v305, -0.105360515
        %vm307 = vcmp.ge.f32.partialorder %v264, 0.0
        %v308 = vmax.f32 %v296, %v306
        %v309 = vmax.f32 %v308, 0.0
        %v310 = vsel %vm307, %v309, 0.0
        %v311 = vadd.f32 %v288, %v310
        %v312 = vlaneseq
        %v313 = vshrl.u32 %v312, 7
        %v314 = vlaneseq
        %v315 = vand.u32 %v314, 127
        %s316 = sadd.s32 %s25, %s26
        %s317 = smul.u32 %s316, 1024
        %v318 = vmul.u32 %v313, 128
        %v319 = vstv %s317
        %v320 = vadd.s32 %v319, %v318
        %v321 = vadd.s32 %v320, %v315
        %vm322 = vcmp.lt.s32.totalorder %v321, 128
        %v323 = vsel %vm322, %v311, 0.0
        %v324 = vld [vmem:[#allocation2] sm:$0xff]
        %v325 = vadd.f32 %v324, %v323
        %326 = vst [vmem:[#allocation2] sm:$0xff] %v325
        // Predicated region
        $region49: #{tpu_custom_call.1} parent=31 // pred_check
          %p327 = pneg %p259
        $region50: #{tpu_custom_call.1} parent=31 // pred_check_branch
          %329 = sbr.rel (%p327) target = $region52
        $region51: #{tpu_custom_call.1} parent=31 // pred_region
          %v330 = vld [vmem:[#allocation2] sm:$0xff]
          %331 = vadd.xlane.f32.xlu0 %v330
          %v332 = vpop.xlane.xlu0 %331
          %v333 = vrot.slane %v332, 4
          %v334 = vadd.f32 %v332, %v333
          %v335 = vrot.slane %v334, 2
          %v336 = vadd.f32 %v334, %v335
          %v337 = vrot.slane %v336, 1
          %v338 = vadd.f32 %v336, %v337
          %s339 = vtos %v338
          %v340 = vstv %s339
          %v341 = vadd.f32 %v340, 0.0
          %342 = vst [vmem:[%s256] sm:$0xff] %v341
        $region52: #{tpu_custom_call.1} parent=31 // pred_fallthru
          _
        %s343 = sand.u32 %s118, 1
        %s344 = scalar_lea.sflag [#allocation5], %s343
        %s345 = sand.u32 %s118, 1
        %s346 = smul.addr %s345, 8
        %s347 = scalar_lea.vmem [#allocation9], %s346
        // Predicated region
        $region53: #{tpu_custom_call.1} parent=31 // pred_check
          %p348 = pneg %p128
        $region54: #{tpu_custom_call.1} parent=31 // pred_check_branch
          %350 = sbr.rel (%p348) target = $region56
        $region55: #{tpu_custom_call.1} parent=31 // pred_region
          %352 = vsyncadd %s344, 0
          %s353 = smul.addr %s25, 8
          %s354 = scalar_lea.hbm %s3, %s353
          %s356 = sshll.u32 %s347, 4
          %s357 = int_to_ptr.vmem [resolvable:$true] %s356
          %s358 = sshll.u32 %s354, 4
          %s359 = int_to_ptr.hbm [resolvable:$true] %s358
          %361 = dma.vmem_to_hbm [thread:$0]  %s357, 128, %s359, %s344
        $region56: #{tpu_custom_call.1} parent=31 // pred_fallthru
          _
      $region32: #{tpu_custom_call.1} parent=5 // pred_fallthru
        _
      %p362 = scmp.le.s32.totalorder 2, %s16
      // Predicated region
      $region57: #{tpu_custom_call.1} parent=5 // pred_check
        %p363 = pneg %p362
      $region58: #{tpu_custom_call.1} parent=5 // pred_check_branch
        %365 = sbr.rel (%p363) target = $region60
      $region59: #{tpu_custom_call.1} parent=5 // pred_region
        %s366 = ssub.s32 %s16, 2
        // Predicated region
        $region61: #{tpu_custom_call.1} parent=59 // pred_check
          %p367 = pneg %p134
        $region62: #{tpu_custom_call.1} parent=59 // pred_check_branch
          %369 = sbr.rel (%p367) target = $region64
        $region63: #{tpu_custom_call.1} parent=59 // pred_region
          %s370 = sand.u32 %s119, 1
          %s371 = scalar_lea.sflag [#allocation5], %s370
          %s372 = sand.u32 %s119, 1
          %s373 = smul.addr %s372, 8
          %s374 = scalar_lea.vmem [#allocation9], %s373
          %376 = dma.done %s371, 128
        $region64: #{tpu_custom_call.1} parent=59 // pred_fallthru
          _
      $region60: #{tpu_custom_call.1} parent=5 // pred_fallthru
        _
    $region6: #{tpu_custom_call.1} parent=1 // loop_footer
      %s20 = sadd.s32 1, %s16
    $region7: #{tpu_custom_call.1} parent=1 // loop_footer_branch
      %15 = sbr.rel target = $region3
    $region8: #{tpu_custom_call.1} parent=1 // loop_exit
      _
    %377 = vsyncpa [#allocation4], 1
    %s378 = scalar_lea.sflag [#allocation4], 1
    %379 = vsyncpa %s378, 1
    %380 = vsyncpa [#allocation7], 1
    %s381 = scalar_lea.sflag [#allocation7], 1
    %382 = vsyncpa %s381, 1
    %383 = vsyncpa [#allocation5], 1
    %s384 = scalar_lea.sflag [#allocation5], 1
    %385 = vsyncpa %s384, 1

</llo_original>
